<compile_context>
chip_gen: v5e
topology: v5e:2x2
jax: 0.10.0
libtpu: 0.0.40
codegen_flags: <defaults>
</compile_context>

<pallas_src>
import jax
import jax.numpy as jnp
import numpy as np
from jax.experimental import pallas as pl
from jax.experimental.pallas import tpu as pltpu


def _round_up(n: int, m: int) -> int:
    return ((n + m - 1) // m) * m


def autoencoder_kernel(x_ref, w_enc_ref, b_enc_ref, w_dec_ref, b_dec_ref, o_ref):
    """Fused encoder+decoder for one batch tile: sigmoid(relu(x@W1+b1)@W2+b2)."""
    # Encoder: Linear(D -> L) + ReLU.  bf16 MXU operands, f32 accumulation.
    x = x_ref[...].astype(jnp.bfloat16)                               # (TB, D)
    h = jnp.dot(x, w_enc_ref[...], preferred_element_type=jnp.float32)
    h = jnp.maximum(h + b_enc_ref[...], 0.0)                          # f32 (TB, Lp)

    # Decoder: Linear(L -> D) + Sigmoid.
    y = jnp.dot(h.astype(jnp.bfloat16), w_dec_ref[...],
                preferred_element_type=jnp.float32)
    y = y + b_dec_ref[...]                                            # f32 (TB, D)
    o_ref[...] = jax.nn.sigmoid(y).astype(o_ref.dtype)


def _vmem_footprint_bytes(tb, d, l_pad, x_bytes, out_bytes):
    """Rough VMEM footprint for a given batch tile."""
    act_in = 2 * tb * d * x_bytes          # double-buffered input tile
    act_out = 2 * tb * d * out_bytes       # double-buffered output tile
    hidden = tb * l_pad * 4                # f32 intermediate h
    weights = 2 * d * l_pad * 2            # bf16 W_enc + W_dec, single-buffered
    biases = (l_pad + d) * 4 * 2
    return act_in + act_out + hidden + weights + biases


def _choose_batch_tile(b_pad, cap, fits):
    """Largest multiple-of-8 divisor of b_pad that is <= cap and fits VMEM."""
    best = 8
    for cand in range(8, min(cap, b_pad) + 1, 8):
        if b_pad % cand == 0 and fits(cand):
            best = cand
    return best


def autoencoder_forward(x, w_enc, b_enc, w_dec, b_dec, in_shape, *,
                        block_b=None, out_dtype=None):
    """x: (B, H, W).  Returns reconstructed (B, H, W).

    w_enc: (D, L), b_enc: (L,), w_dec: (L, D), b_dec: (D,) -- already laid out
    for x @ W (i.e. transposed vs. PyTorch nn.Linear.weight).  Weights are fed
    to the MXU in bf16; accumulation stays f32.  Output dtype defaults to the
    input dtype.
    """
    B = x.shape[0]
    H, W = in_shape
    D = H * W
    L = w_enc.shape[1]
    L_pad = _round_up(L, 128)             # lane-dense hidden; do NOT pad to 256
    out_dtype = x.dtype if out_dtype is None else out_dtype

    # --- per-generation VMEM budget --------------------------------------
    try:
        vmem_cap = int(pltpu.get_tpu_info().vmem_capacity_bytes)
    except Exception:
        vmem_cap = 64 << 20               # conservative: v7x per-TensorCore VMEM
    if block_b is None:
        block_b = 1024 if vmem_cap >= (96 << 20) else 512   # v5e/v6e vs v7x
    budget = int(0.45 * vmem_cap)          # headroom for compiler scratch

    # --- activations: no pad/cast pass over x -----------------------------
    # reshape(B, H*W) is a free row-major view; the only possible copy is the
    # <=7-row sublane pad of the batch when B % 8 != 0.
    x2 = x.reshape(B, D)
    B_pad = _round_up(B, 8)
    if B_pad != B:
        x2 = jnp.pad(x2, ((0, B_pad - B), (0, 0)))

    # --- batch tile: divisor of B_pad (no dead rows), >=2 grid steps ------
    cap = min(block_b, B_pad)
    if B_pad >= 16:
        cap = min(cap, B_pad // 2)         # >=2 steps -> both v7x TCs get work
    x_bytes = jnp.dtype(x.dtype).itemsize
    out_bytes = jnp.dtype(out_dtype).itemsize
    fits = lambda tb: _vmem_footprint_bytes(tb, D, L_pad, x_bytes, out_bytes) <= budget
    TB = _choose_batch_tile(B_pad, cap, fits)
    grid = (B_pad // TB,)

    vmem_limit = int(min(
        vmem_cap,
        max(32 << 20,
            _vmem_footprint_bytes(TB, D, L_pad, x_bytes, out_bytes) + (16 << 20))))

    # --- weights / biases: tiny one-time pads, bf16 weights ---------------
    # Zero-padding of L is inert: padded W_enc cols & b_enc entries are 0 so
    # padded h cols are relu(0)=0; padded W_dec rows are 0 -> no contribution.
    w_enc_p = jnp.pad(w_enc, ((0, 0), (0, L_pad - L))).astype(jnp.bfloat16)
    w_dec_p = jnp.pad(w_dec, ((0, L_pad - L), (0, 0))).astype(jnp.bfloat16)
    b_enc_p = jnp.pad(b_enc.astype(jnp.float32), (0, L_pad - L)).reshape(1, L_pad)
    b_dec_p = b_dec.astype(jnp.float32).reshape(1, D)

    def run(resident_kw):
        return pl.pallas_call(
            autoencoder_kernel,
            out_shape=jax.ShapeDtypeStruct((B_pad, D), out_dtype),
            grid=grid,
            in_specs=[
                # Activations stream over the batch grid.
                pl.BlockSpec((TB, D), lambda i: (i, 0)),
                # Weights / biases: constant index_map -> DMA'd once, VMEM-resident.
                pl.BlockSpec((D, L_pad), lambda i: (0, 0), **resident_kw),
                pl.BlockSpec((1, L_pad), lambda i: (0, 0), **resident_kw),
                pl.BlockSpec((L_pad, D), lambda i: (0, 0), **resident_kw),
                pl.BlockSpec((1, D), lambda i: (0, 0), **resident_kw),
            ],
            out_specs=pl.BlockSpec((TB, D), lambda i: (i, 0)),
            compiler_params=pltpu.CompilerParams(
                dimension_semantics=("parallel",),   # batch tiles independent
                vmem_limit_bytes=vmem_limit,
            ),
        )(x2, w_enc_p, b_enc_p, w_dec_p, b_dec_p)

    try:
        # Single-buffer the grid-invariant weight/bias blocks (halves their
        # VMEM footprint for large models).
        out = run({"pipeline_mode": pl.Buffered(1)})
    except Exception:
        # Fallback: constant index_maps alone already keep the weights resident
        # (just default double-buffered) if this jax build rejects
        # pipeline_mode on pallas_call block specs.
        out = run({})

    if B_pad != B:
        out = out[:B]
    return out.reshape(B, H, W)


def xavier_uniform(key, fan_in, fan_out, dtype=jnp.float32):
    """Matches nn.init.xavier_uniform_ (gain=1); stored as (fan_in, fan_out)."""
    limit = float(np.sqrt(6.0 / (fan_in + fan_out)))
    return jax.random.uniform(key, (fan_in, fan_out), dtype=dtype,
                              minval=-limit, maxval=limit)


if __name__ == "__main__":
    # Shapes consistent with the module: in_shape=(16, 16) -> in_dim=256,
    # latent_dim=64.
    in_shape = (16, 16)
    latent_dim = 64
    D = in_shape[0] * in_shape[1]

    key = jax.random.PRNGKey(0)
    k_x1, k_x2, k_we, k_wd = jax.random.split(key, 4)

    # Parameters (deterministic in-script init mirroring _init_weights).
    w_enc = xavier_uniform(k_we, D, latent_dim)            # (D, L)
    b_enc = jnp.full((latent_dim,), 0.01, dtype=jnp.float32)
    w_dec = xavier_uniform(k_wd, latent_dim, D)            # (L, D)
    b_dec = jnp.full((D,), 0.01, dtype=jnp.float32)

    def reference(x):
        b = x.shape[0]
        return jax.nn.sigmoid(
            jnp.maximum(x.reshape(b, D) @ w_enc + b_enc, 0.0) @ w_dec + b_dec
        ).reshape(b, *in_shape)

    # Case 1: aligned batch (B=8, multiple of 8) -> zero-copy activation path.
    x1 = jax.random.normal(k_x1, (8,) + in_shape, dtype=jnp.float32)
    out1 = jax.block_until_ready(
        autoencoder_forward(x1, w_enc, b_enc, w_dec, b_dec, in_shape))

    # Case 2: ragged batch (B=13) -> sublane pad to 16, TB=8, 2-step grid.
    x2 = jax.random.normal(k_x2, (13,) + in_shape, dtype=jnp.float32)
    out2 = jax.block_until_ready(
        autoencoder_forward(x2, w_enc, b_enc, w_dec, b_dec, in_shape))

    # Sanity checks against pure-f32 JAX references of the same math.
    # Tolerance reflects bf16 MXU operands (f32 accumulation); sigmoid output
    # is in [0, 1] so atol dominates.
    np.testing.assert_allclose(np.asarray(out1), np.asarray(reference(x1)),
                               rtol=0.0, atol=2e-2)
    np.testing.assert_allclose(np.asarray(out2), np.asarray(reference(x2)),
                               rtol=0.0, atol=2e-2)
    assert out1.shape == (8,) + in_shape and out2.shape == (13,) + in_shape

    print("KERNEL_OK")
</pallas_src>

<mosaic_0001>
module attributes {stable_mosaic.version = 11 : i64} {
  func.func @autoencoder_kernel(%arg0: i32, %arg1: memref<8x256xf32, #tpu.memory_space<vmem>>, %arg2: memref<256x128xbf16, #tpu.memory_space<vmem>>, %arg3: memref<1x128xf32, #tpu.memory_space<vmem>>, %arg4: memref<128x256xbf16, #tpu.memory_space<vmem>>, %arg5: memref<1x256xf32, #tpu.memory_space<vmem>>, %arg6: memref<8x256xf32, #tpu.memory_space<vmem>>) attributes {dimension_semantics = [#tpu.dimension_semantics<parallel>], iteration_bounds = array<i64: 1>, scalar_prefetch = 0 : i64, scratch_operands = 0 : i64, tpu.core_type = #tpu.core_type<tc>, window_params = [{transform_indices = @transform_0, window_bounds = array<i64: 8, 256>}, {pipeline_mode = #tpu.pipeline_mode<synchronous>, transform_indices = @transform_1, window_bounds = array<i64: 256, 128>}, {pipeline_mode = #tpu.pipeline_mode<synchronous>, transform_indices = @transform_2, window_bounds = array<i64: 1, 128>}, {pipeline_mode = #tpu.pipeline_mode<synchronous>, transform_indices = @transform_3, window_bounds = array<i64: 128, 256>}, {pipeline_mode = #tpu.pipeline_mode<synchronous>, transform_indices = @transform_4, window_bounds = array<i64: 1, 256>}, {transform_indices = @transform_5, window_bounds = array<i64: 8, 256>}]} {
    %c0 = arith.constant 0 : index
    %c0_0 = arith.constant 0 : index
    %0 = vector.load %arg1[%c0, %c0_0] : memref<8x256xf32, #tpu.memory_space<vmem>>, vector<8x256xf32>
    %1 = arith.truncf %0 : vector<8x256xf32> to vector<8x256xbf16>
    %c0_1 = arith.constant 0 : index
    %c0_2 = arith.constant 0 : index
    %2 = vector.load %arg2[%c0_1, %c0_2] : memref<256x128xbf16, #tpu.memory_space<vmem>>, vector<256x128xbf16>
    %cst = arith.constant dense<0.000000e+00> : vector<8x128xf32>
    %3 = tpu.matmul %1, %2, %cst {dimension_numbers = #tpu.dot_dimension_numbers<[1], [0], [0], [1], [0, 0, 1, 1], [], []>} : vector<8x256xbf16>, vector<256x128xbf16>, vector<8x128xf32> -> vector<8x128xf32>
    %c0_3 = arith.constant 0 : index
    %c0_4 = arith.constant 0 : index
    %4 = vector.load %arg3[%c0_3, %c0_4] : memref<1x128xf32, #tpu.memory_space<vmem>>, vector<1x128xf32>
    %5 = vector.broadcast %4 : vector<1x128xf32> to vector<8x128xf32>
    %6 = arith.addf %3, %5 : vector<8x128xf32>
    %cst_5 = arith.constant 0.000000e+00 : f32
    %7 = vector.broadcast %cst_5 : f32 to vector<8x128xf32>
    %8 = arith.maximumf %6, %7 : vector<8x128xf32>
    %9 = arith.truncf %8 : vector<8x128xf32> to vector<8x128xbf16>
    %c0_6 = arith.constant 0 : index
    %c0_7 = arith.constant 0 : index
    %10 = vector.load %arg4[%c0_6, %c0_7] : memref<128x256xbf16, #tpu.memory_space<vmem>>, vector<128x256xbf16>
    %cst_8 = arith.constant dense<0.000000e+00> : vector<8x256xf32>
    %11 = tpu.matmul %9, %10, %cst_8 {dimension_numbers = #tpu.dot_dimension_numbers<[1], [0], [0], [1], [0, 0, 1, 1], [], []>} : vector<8x128xbf16>, vector<128x256xbf16>, vector<8x256xf32> -> vector<8x256xf32>
    %c0_9 = arith.constant 0 : index
    %c0_10 = arith.constant 0 : index
    %12 = vector.load %arg5[%c0_9, %c0_10] : memref<1x256xf32, #tpu.memory_space<vmem>>, vector<1x256xf32>
    %13 = vector.broadcast %12 : vector<1x256xf32> to vector<8x256xf32>
    %14 = arith.addf %11, %13 : vector<8x256xf32>
    %15 = arith.negf %14 : vector<8x256xf32>
    %16 = math.exp %15 : vector<8x256xf32>
    %cst_11 = arith.constant 1.000000e+00 : f32
    %17 = vector.broadcast %cst_11 : f32 to vector<8x256xf32>
    %18 = arith.addf %17, %16 : vector<8x256xf32>
    %19 = arith.divf %17, %18 : vector<8x256xf32>
    %c0_12 = arith.constant 0 : index
    %c0_13 = arith.constant 0 : index
    %20 = vector.load %arg6[%c0_12, %c0_13] : memref<8x256xf32, #tpu.memory_space<vmem>>, vector<8x256xf32>
    tpu.vector_store %arg6[%c0_12, %c0_13], %19 {strides = array<i32>} : memref<8x256xf32, #tpu.memory_space<vmem>>, vector<8x256xf32>,
    return
  }
  func.func @transform_0(%arg0: i32) -> (i32, i32) {
    %c0_i32 = arith.constant 0 : i32
    %c0_i32_0 = arith.constant 0 : i32
    return %arg0, %c0_i32 : i32, i32
  }
  func.func @transform_1(%arg0: i32) -> (i32, i32) {
    %c0_i32 = arith.constant 0 : i32
    %c0_i32_0 = arith.constant 0 : i32
    %c0_i32_1 = arith.constant 0 : i32
    return %c0_i32, %c0_i32_0 : i32, i32
  }
  func.func @transform_2(%arg0: i32) -> (i32, i32) {
    %c0_i32 = arith.constant 0 : i32
    %c0_i32_0 = arith.constant 0 : i32
    %c0_i32_1 = arith.constant 0 : i32
    return %c0_i32, %c0_i32_0 : i32, i32
  }
  func.func @transform_3(%arg0: i32) -> (i32, i32) {
    %c0_i32 = arith.constant 0 : i32
    %c0_i32_0 = arith.constant 0 : i32
    %c0_i32_1 = arith.constant 0 : i32
    return %c0_i32, %c0_i32_0 : i32, i32
  }
  func.func @transform_4(%arg0: i32) -> (i32, i32) {
    %c0_i32 = arith.constant 0 : i32
    %c0_i32_0 = arith.constant 0 : i32
    %c0_i32_1 = arith.constant 0 : i32
    return %c0_i32, %c0_i32_0 : i32, i32
  }
  func.func @transform_5(%arg0: i32) -> (i32, i32) {
    %c0_i32 = arith.constant 0 : i32
    %c0_i32_0 = arith.constant 0 : i32
    return %arg0, %c0_i32 : i32, i32
  }
}

module attributes {stable_mosaic.version = 11 : i64} {
  func.func @autoencoder_kernel(%arg0: i32, %arg1: memref<8x256xf32, #tpu.memory_space<vmem>>, %arg2: memref<256x128xbf16, #tpu.memory_space<vmem>>, %arg3: memref<1x128xf32, #tpu.memory_space<vmem>>, %arg4: memref<128x256xbf16, #tpu.memory_space<vmem>>, %arg5: memref<1x256xf32, #tpu.memory_space<vmem>>, %arg6: memref<8x256xf32, #tpu.memory_space<vmem>>) attributes {dimension_semantics = [#tpu.dimension_semantics<parallel>], iteration_bounds = array<i64: 1>, scalar_prefetch = 0 : i64, scratch_operands = 0 : i64, tpu.core_type = #tpu.core_type<tc>, window_params = [{transform_indices = @transform_0, window_bounds = array<i64: 8, 256>}, {pipeline_mode = #tpu.pipeline_mode<synchronous>, transform_indices = @transform_1, window_bounds = array<i64: 256, 128>}, {pipeline_mode = #tpu.pipeline_mode<synchronous>, transform_indices = @transform_2, window_bounds = array<i64: 1, 128>}, {pipeline_mode = #tpu.pipeline_mode<synchronous>, transform_indices = @transform_3, window_bounds = array<i64: 128, 256>}, {pipeline_mode = #tpu.pipeline_mode<synchronous>, transform_indices = @transform_4, window_bounds = array<i64: 1, 256>}, {transform_indices = @transform_5, window_bounds = array<i64: 8, 256>}]} {
    %c0 = arith.constant 0 : index
    %c0_0 = arith.constant 0 : index
    %0 = vector.load %arg1[%c0, %c0_0] : memref<8x256xf32, #tpu.memory_space<vmem>>, vector<8x256xf32>
    %1 = arith.truncf %0 : vector<8x256xf32> to vector<8x256xbf16>
    %c0_1 = arith.constant 0 : index
    %c0_2 = arith.constant 0 : index
    %2 = vector.load %arg2[%c0_1, %c0_2] : memref<256x128xbf16, #tpu.memory_space<vmem>>, vector<256x128xbf16>
    %cst = arith.constant dense<0.000000e+00> : vector<8x128xf32>
    %3 = tpu.matmul %1, %2, %cst {dimension_numbers = #tpu.dot_dimension_numbers<[1], [0], [0], [1], [0, 0, 1, 1], [], []>} : vector<8x256xbf16>, vector<256x128xbf16>, vector<8x128xf32> -> vector<8x128xf32>
    %c0_3 = arith.constant 0 : index
    %c0_4 = arith.constant 0 : index
    %4 = vector.load %arg3[%c0_3, %c0_4] : memref<1x128xf32, #tpu.memory_space<vmem>>, vector<1x128xf32>
    %5 = vector.broadcast %4 : vector<1x128xf32> to vector<8x128xf32>
    %6 = arith.addf %3, %5 : vector<8x128xf32>
    %cst_5 = arith.constant 0.000000e+00 : f32
    %7 = vector.broadcast %cst_5 : f32 to vector<8x128xf32>
    %8 = arith.maximumf %6, %7 : vector<8x128xf32>
    %9 = arith.truncf %8 : vector<8x128xf32> to vector<8x128xbf16>
    %c0_6 = arith.constant 0 : index
    %c0_7 = arith.constant 0 : index
    %10 = vector.load %arg4[%c0_6, %c0_7] : memref<128x256xbf16, #tpu.memory_space<vmem>>, vector<128x256xbf16>
    %cst_8 = arith.constant dense<0.000000e+00> : vector<8x256xf32>
    %11 = tpu.matmul %9, %10, %cst_8 {dimension_numbers = #tpu.dot_dimension_numbers<[1], [0], [0], [1], [0, 0, 1, 1], [], []>} : vector<8x128xbf16>, vector<128x256xbf16>, vector<8x256xf32> -> vector<8x256xf32>
    %c0_9 = arith.constant 0 : index
    %c0_10 = arith.constant 0 : index
    %12 = vector.load %arg5[%c0_9, %c0_10] : memref<1x256xf32, #tpu.memory_space<vmem>>, vector<1x256xf32>
    %13 = vector.broadcast %12 : vector<1x256xf32> to vector<8x256xf32>
    %14 = arith.addf %11, %13 : vector<8x256xf32>
    %15 = arith.negf %14 : vector<8x256xf32>
    %16 = math.exp %15 : vector<8x256xf32>
    %cst_11 = arith.constant 1.000000e+00 : f32
    %17 = vector.broadcast %cst_11 : f32 to vector<8x256xf32>
    %18 = arith.addf %17, %16 : vector<8x256xf32>
    %19 = arith.divf %17, %18 : vector<8x256xf32>
    %c0_12 = arith.constant 0 : index
    %c0_13 = arith.constant 0 : index
    %20 = vector.load %arg6[%c0_12, %c0_13] : memref<8x256xf32, #tpu.memory_space<vmem>>, vector<8x256xf32>
    tpu.vector_store %arg6[%c0_12, %c0_13], %19 {strides = array<i32>} : memref<8x256xf32, #tpu.memory_space<vmem>>, vector<8x256xf32>,
    return
  }
  func.func @transform_0(%arg0: i32) -> (i32, i32) {
    %c0_i32 = arith.constant 0 : i32
    %c0_i32_0 = arith.constant 0 : i32
    return %arg0, %c0_i32 : i32, i32
  }
  func.func @transform_1(%arg0: i32) -> (i32, i32) {
    %c0_i32 = arith.constant 0 : i32
    %c0_i32_0 = arith.constant 0 : i32
    %c0_i32_1 = arith.constant 0 : i32
    return %c0_i32, %c0_i32_0 : i32, i32
  }
  func.func @transform_2(%arg0: i32) -> (i32, i32) {
    %c0_i32 = arith.constant 0 : i32
    %c0_i32_0 = arith.constant 0 : i32
    %c0_i32_1 = arith.constant 0 : i32
    return %c0_i32, %c0_i32_0 : i32, i32
  }
  func.func @transform_3(%arg0: i32) -> (i32, i32) {
    %c0_i32 = arith.constant 0 : i32
    %c0_i32_0 = arith.constant 0 : i32
    %c0_i32_1 = arith.constant 0 : i32
    return %c0_i32, %c0_i32_0 : i32, i32
  }
  func.func @transform_4(%arg0: i32) -> (i32, i32) {
    %c0_i32 = arith.constant 0 : i32
    %c0_i32_0 = arith.constant 0 : i32
    %c0_i32_1 = arith.constant 0 : i32
    return %c0_i32, %c0_i32_0 : i32, i32
  }
  func.func @transform_5(%arg0: i32) -> (i32, i32) {
    %c0_i32 = arith.constant 0 : i32
    %c0_i32_0 = arith.constant 0 : i32
    return %arg0, %c0_i32 : i32, i32
  }
}

</mosaic_0001>

<llo_original>
// kernel: tpu_custom_call.1
$region0: #{tpu_custom_call.1}
  #allocation0 [shape = 'u32[]', space=smem, size = 0x4, offset = 0x4, fixed_abs, tag = 'smem constant byte address 0x4 - core index']
  #allocation1 [shape = 'u32[72,128]{1,0:T(1,128)}', space=vmem, size = 0x9000, scoped, tag = 'internal scratch']
  %s0 = inlined_call_operand.hbm [shape: f32[8,256], index: 0, kind: input, shape index: {}]
  %s1 = inlined_call_operand.hbm [shape: bf16[256,128], index: 1, kind: input, shape index: {}]
  %s2 = inlined_call_operand.vmem [shape: f32[1,128], index: 2, kind: input, shape index: {}]
  %s3 = inlined_call_operand.hbm [shape: bf16[128,256], index: 3, kind: input, shape index: {}]
  %s4 = inlined_call_operand.vmem [shape: f32[1,256], index: 4, kind: input, shape index: {}]
  %s5 = inlined_call_operand.hbm [shape: f32[8,256], index: 5, kind: output, shape index: {}]
  %s6 = sld [smem:[#allocation0]]
  $region42: #{tpu_custom_call.1} parent=0
    _
  %s8 = ssub.s32 1, %s6
  %s9 = scalar_select 0, %s8, %s6
  $region1: #{tpu_custom_call.1} parent=0
    #allocation2 [shape = 'u8[8192]{0}', space=vmem, size = 0x2000, scoped, tag = 'input window, operand 0, single buffered']
    #allocation3 [shape = 's32[1]{0}', space=sflag, size = 0x4, scoped, tag = 'scoped memory for tpu_custom_call.1']
    #allocation4 [shape = 's32[1]{0}', space=sflag, size = 0x4, scoped, tag = 'scoped memory for tpu_custom_call.1']
    #allocation5 [shape = 'u8[65536]{0}', space=vmem, size = 0x10000, scoped, tag = 'input window, operand 1, single buffered']
    #allocation6 [shape = 's32[1]{0}', space=sflag, size = 0x4, scoped, tag = 'scoped memory for tpu_custom_call.1']
    #allocation7 [shape = 'u8[65536]{0}', space=vmem, size = 0x10000, scoped, tag = 'input window, operand 3, single buffered']
    #allocation8 [shape = 'u8[8192]{0}', space=vmem, size = 0x2000, scoped, tag = 'output window, operand 0, single buffered']
    %10 = vsyncpa [#allocation3], 0
    %11 = vsyncpa [#allocation6], 0
    %12 = vsyncpa [#allocation4], 0
    // Predicated region
    $region2: #{tpu_custom_call.1} parent=1 // pred_check
      _
    $region3: #{tpu_custom_call.1} parent=1 // pred_check_branch
      %14 = sbr.rel (0) target = $region5
    $region4: #{tpu_custom_call.1} parent=1 // pred_region
      %16 = vsyncadd [#allocation3], 0
      %s18 = sshll.u32 %s0, 4
      %s19 = int_to_ptr.hbm [resolvable:$true] %s18
      %s20 = sshll.u32 [#allocation2], 4
      %s21 = int_to_ptr.vmem [resolvable:$true] %s20
      %23 = dma.hbm_to_vmem [thread:$0]  %s19, 256, %s21, [#allocation3]
    $region5: #{tpu_custom_call.1} parent=1 // pred_fallthru
      _
    // Predicated region
    $region6: #{tpu_custom_call.1} parent=1 // pred_check
      _
    $region7: #{tpu_custom_call.1} parent=1 // pred_check_branch
      %25 = sbr.rel (0) target = $region9
    $region8: #{tpu_custom_call.1} parent=1 // pred_region
      %27 = vsyncadd [#allocation6], 0
      %s28 = sshll.u32 %s1, 4
      %s29 = int_to_ptr.hbm [resolvable:$true] %s28
      %s30 = sshll.u32 [#allocation5], 4
      %s31 = int_to_ptr.vmem [resolvable:$true] %s30
      %36 = dma.hbm_to_vmem [thread:$0]  %s29, 2048, %s31, [#allocation6], 64, 64, 4
    $region9: #{tpu_custom_call.1} parent=1 // pred_fallthru
      _
    // Predicated region
    $region10: #{tpu_custom_call.1} parent=1 // pred_check
      _
    $region11: #{tpu_custom_call.1} parent=1 // pred_check_branch
      %38 = sbr.rel (0) target = $region13
    $region12: #{tpu_custom_call.1} parent=1 // pred_region
      _
    $region13: #{tpu_custom_call.1} parent=1 // pred_fallthru
      _
    // Predicated region
    $region14: #{tpu_custom_call.1} parent=1 // pred_check
      _
    $region15: #{tpu_custom_call.1} parent=1 // pred_check_branch
      %40 = sbr.rel (0) target = $region17
    $region16: #{tpu_custom_call.1} parent=1 // pred_region
      %42 = vsyncadd [#allocation6], 0
      %s43 = sshll.u32 %s3, 4
      %s44 = int_to_ptr.hbm [resolvable:$true] %s43
      %s45 = sshll.u32 [#allocation7], 4
      %s46 = int_to_ptr.vmem [resolvable:$true] %s45
      %51 = dma.hbm_to_vmem [thread:$0]  %s44, 2048, %s46, [#allocation6], 128, 128, 8
    $region17: #{tpu_custom_call.1} parent=1 // pred_fallthru
      _
    // Predicated region
    $region18: #{tpu_custom_call.1} parent=1 // pred_check
      _
    $region19: #{tpu_custom_call.1} parent=1 // pred_check_branch
      %53 = sbr.rel (0) target = $region21
    $region20: #{tpu_custom_call.1} parent=1 // pred_region
      _
    $region21: #{tpu_custom_call.1} parent=1 // pred_fallthru
      _
    // Predicated region
    $region22: #{tpu_custom_call.1} parent=1 // pred_check
      _
    $region23: #{tpu_custom_call.1} parent=1 // pred_check_branch
      %55 = sbr.rel (0) target = $region25
    $region24: #{tpu_custom_call.1} parent=1 // pred_region
      %57 = dma.done [#allocation3], 256
    $region25: #{tpu_custom_call.1} parent=1 // pred_fallthru
      _
    // Predicated region
    $region26: #{tpu_custom_call.1} parent=1 // pred_check
      _
    $region27: #{tpu_custom_call.1} parent=1 // pred_check_branch
      %59 = sbr.rel (0) target = $region29
    $region28: #{tpu_custom_call.1} parent=1 // pred_region
      %61 = dma.done [#allocation6], 2048
    $region29: #{tpu_custom_call.1} parent=1 // pred_fallthru
      _
    // Predicated region
    $region30: #{tpu_custom_call.1} parent=1 // pred_check
      _
    $region31: #{tpu_custom_call.1} parent=1 // pred_check_branch
      %63 = sbr.rel (0) target = $region33
    $region32: #{tpu_custom_call.1} parent=1 // pred_region
      %65 = dma.done [#allocation6], 2048
    $region33: #{tpu_custom_call.1} parent=1 // pred_fallthru
      _
    %v66 = vld [vmem:[#allocation2] sm:$0xff]
    %v67 = vld [vmem:[#allocation2 + $0x8] sm:$0xff]
    %v68 = vpack.c.bf16 %v66, %v66
    %v69 = vpack.c.bf16 %v67, %v67
    %v70 = vld [vmem:[#allocation5] sm:$0xf]
    %v71 = vld [vmem:[#allocation5 + $0x4] sm:$0xf]
    %v72 = vld [vmem:[#allocation5 + $0x8] sm:$0xf]
    %v73 = vld [vmem:[#allocation5 + $0xc] sm:$0xf]
    %v74 = vld [vmem:[#allocation5 + $0x10] sm:$0xf]
    %v75 = vld [vmem:[#allocation5 + $0x14] sm:$0xf]
    %v76 = vld [vmem:[#allocation5 + $0x18] sm:$0xf]
    %v77 = vld [vmem:[#allocation5 + $0x1c] sm:$0xf]
    %v78 = vld [vmem:[#allocation5 + $0x20] sm:$0xf]
    %v79 = vld [vmem:[#allocation5 + $0x24] sm:$0xf]
    %v80 = vld [vmem:[#allocation5 + $0x28] sm:$0xf]
    %v81 = vld [vmem:[#allocation5 + $0x2c] sm:$0xf]
    %v82 = vld [vmem:[#allocation5 + $0x30] sm:$0xf]
    %v83 = vld [vmem:[#allocation5 + $0x34] sm:$0xf]
    %v84 = vld [vmem:[#allocation5 + $0x38] sm:$0xf]
    %v85 = vld [vmem:[#allocation5 + $0x3c] sm:$0xf]
    %v86 = vld [vmem:[#allocation5 + $0x40] sm:$0xf]
    %v87 = vld [vmem:[#allocation5 + $0x44] sm:$0xf]
    %v88 = vld [vmem:[#allocation5 + $0x48] sm:$0xf]
    %v89 = vld [vmem:[#allocation5 + $0x4c] sm:$0xf]
    %v90 = vld [vmem:[#allocation5 + $0x50] sm:$0xf]
    %v91 = vld [vmem:[#allocation5 + $0x54] sm:$0xf]
    %v92 = vld [vmem:[#allocation5 + $0x58] sm:$0xf]
    %v93 = vld [vmem:[#allocation5 + $0x5c] sm:$0xf]
    %v94 = vld [vmem:[#allocation5 + $0x60] sm:$0xf]
    %v95 = vld [vmem:[#allocation5 + $0x64] sm:$0xf]
    %v96 = vld [vmem:[#allocation5 + $0x68] sm:$0xf]
    %v97 = vld [vmem:[#allocation5 + $0x6c] sm:$0xf]
    %v98 = vld [vmem:[#allocation5 + $0x70] sm:$0xf]
    %v99 = vld [vmem:[#allocation5 + $0x74] sm:$0xf]
    %v100 = vld [vmem:[#allocation5 + $0x78] sm:$0xf]
    %v101 = vld [vmem:[#allocation5 + $0x7c] sm:$0xf]
    %v102 = vld [vmem:[%s2] sm:$0x1]
    %v104 = vperm.slane %v102, 0
    %v138 = vunpack.c.l.b16 %v70
    %v139 = vunpack.c.l.b16 %v71
    %v140 = vunpack.c.l.b16 %v72
    %v141 = vunpack.c.l.b16 %v73
    %v142 = vunpack.c.l.b16 %v74
    %v143 = vunpack.c.l.b16 %v75
    %v144 = vunpack.c.l.b16 %v76
    %v145 = vunpack.c.l.b16 %v77
    %v146 = vunpack.c.l.b16 %v78
    %v147 = vunpack.c.l.b16 %v79
    %v148 = vunpack.c.l.b16 %v80
    %v149 = vunpack.c.l.b16 %v81
    %v150 = vunpack.c.l.b16 %v82
    %v151 = vunpack.c.l.b16 %v83
    %v152 = vunpack.c.l.b16 %v84
    %v153 = vunpack.c.l.b16 %v85
    %v154 = vunpack.c.l.b16 %v86
    %v155 = vunpack.c.l.b16 %v87
    %v156 = vunpack.c.l.b16 %v88
    %v157 = vunpack.c.l.b16 %v89
    %v158 = vunpack.c.l.b16 %v90
    %v159 = vunpack.c.l.b16 %v91
    %v160 = vunpack.c.l.b16 %v92
    %v161 = vunpack.c.l.b16 %v93
    %v162 = vunpack.c.l.b16 %v94
    %v163 = vunpack.c.l.b16 %v95
    %v164 = vunpack.c.l.b16 %v96
    %v165 = vunpack.c.l.b16 %v97
    %v166 = vunpack.c.l.b16 %v98
    %v167 = vunpack.c.l.b16 %v99
    %v168 = vunpack.c.l.b16 %v100
    %v169 = vunpack.c.l.b16 %v101
    %v170 = vpack.c.b16 %v139, %v138
    %v171 = vpack.c.b16 %v141, %v140
    %v172 = vpack.c.b16 %v143, %v142
    %v173 = vpack.c.b16 %v145, %v144
    %v174 = vpack.c.b16 %v147, %v146
    %v175 = vpack.c.b16 %v149, %v148
    %v176 = vpack.c.b16 %v151, %v150
    %v177 = vpack.c.b16 %v153, %v152
    %v178 = vpack.c.b16 %v155, %v154
    %v179 = vpack.c.b16 %v157, %v156
    %v180 = vpack.c.b16 %v159, %v158
    %v181 = vpack.c.b16 %v161, %v160
    %v182 = vpack.c.b16 %v163, %v162
    %v183 = vpack.c.b16 %v165, %v164
    %v184 = vpack.c.b16 %v167, %v166
    %v185 = vpack.c.b16 %v169, %v168
    %202 = vmatpush.bf16.msra.mxu0 %v177
    %203 = vmatpush.bf16.msra.mxu0 %v176
    %204 = vmatpush.bf16.msra.mxu0 %v175
    %205 = vmatpush.bf16.msra.mxu0 %v174
    %206 = vmatpush.bf16.msra.mxu0 %v173
    %207 = vmatpush.bf16.msra.mxu0 %v172
    %208 = vmatpush.bf16.msra.mxu0 %v171
    %209 = vmatpush.bf16.msra.mxu0 %v170
    %210 = vmatmul.bf16.gmra.mxu0 %v68
    %v211 = vpop.f32.mrf.mxu0
    %v212 = vadd.f32 %v104, %v211
    %v213 = vpop.f32.mrf.mxu0
    %214 = vdwg.mxu0
    %215 = vmatpush.bf16.msra.mxu0 %v185
    %216 = vmatpush.bf16.msra.mxu0 %v184
    %217 = vmatpush.bf16.msra.mxu0 %v183
    %218 = vmatpush.bf16.msra.mxu0 %v182
    %219 = vmatpush.bf16.msra.mxu0 %v181
    %220 = vmatpush.bf16.msra.mxu0 %v180
    %221 = vmatpush.bf16.msra.mxu0 %v179
    %222 = vmatpush.bf16.msra.mxu0 %v178
    %223 = vmatmul.bf16.gmra.mxu0 %v69
    %v224 = vpop.f32.mrf.mxu0
    %v225 = vadd.f32 %v212, %v224
    %v226 = vpop.f32.mrf.mxu0
    %227 = vdwg.mxu0
    %v228 = vmax.f32 %v225, 0.0
    %v229 = vpack.c.bf16 %v228, %v228
    %v230 = vld [vmem:[#allocation7] sm:$0xff]
    %v231 = vld [vmem:[#allocation7 + $0x8] sm:$0xff]
    %v232 = vld [vmem:[#allocation7 + $0x10] sm:$0xff]
    %v233 = vld [vmem:[#allocation7 + $0x18] sm:$0xff]
    %v234 = vld [vmem:[#allocation7 + $0x20] sm:$0xff]
    %v235 = vld [vmem:[#allocation7 + $0x28] sm:$0xff]
    %v236 = vld [vmem:[#allocation7 + $0x30] sm:$0xff]
    %v237 = vld [vmem:[#allocation7 + $0x38] sm:$0xff]
    %v238 = vld [vmem:[#allocation7 + $0x40] sm:$0xff]
    %v239 = vld [vmem:[#allocation7 + $0x48] sm:$0xff]
    %v240 = vld [vmem:[#allocation7 + $0x50] sm:$0xff]
    %v241 = vld [vmem:[#allocation7 + $0x58] sm:$0xff]
    %v242 = vld [vmem:[#allocation7 + $0x60] sm:$0xff]
    %v243 = vld [vmem:[#allocation7 + $0x68] sm:$0xff]
    %v244 = vld [vmem:[#allocation7 + $0x70] sm:$0xff]
    %v245 = vld [vmem:[#allocation7 + $0x78] sm:$0xff]
    %v246 = vld [vmem:[%s4] sm:$0x3]
    %v248 = vperm.slane %v246, 0
    %v249 = vperm.slane %v246, 1
    %v268 = vunpack.c.l.b16 %v230
    %v269 = vunpack.c.h.b16 %v230
    %v270 = vunpack.c.l.b16 %v231
    %v271 = vunpack.c.h.b16 %v231
    %v272 = vunpack.c.l.b16 %v232
    %v273 = vunpack.c.h.b16 %v232
    %v274 = vunpack.c.l.b16 %v233
    %v275 = vunpack.c.h.b16 %v233
    %v276 = vunpack.c.l.b16 %v234
    %v277 = vunpack.c.h.b16 %v234
    %v278 = vunpack.c.l.b16 %v235
    %v279 = vunpack.c.h.b16 %v235
    %v280 = vunpack.c.l.b16 %v236
    %v281 = vunpack.c.h.b16 %v236
    %v282 = vunpack.c.l.b16 %v237
    %v283 = vunpack.c.h.b16 %v237
    %v284 = vunpack.c.l.b16 %v238
    %v285 = vunpack.c.h.b16 %v238
    %v286 = vunpack.c.l.b16 %v239
    %v287 = vunpack.c.h.b16 %v239
    %v288 = vunpack.c.l.b16 %v240
    %v289 = vunpack.c.h.b16 %v240
    %v290 = vunpack.c.l.b16 %v241
    %v291 = vunpack.c.h.b16 %v241
    %v292 = vunpack.c.l.b16 %v242
    %v293 = vunpack.c.h.b16 %v242
    %v294 = vunpack.c.l.b16 %v243
    %v295 = vunpack.c.h.b16 %v243
    %v296 = vunpack.c.l.b16 %v244
    %v297 = vunpack.c.h.b16 %v244
    %v298 = vunpack.c.l.b16 %v245
    %v299 = vunpack.c.h.b16 %v245
    %v300 = vpack.c.b16 %v270, %v268
    %v301 = vpack.c.b16 %v271, %v269
    %v302 = vpack.c.b16 %v274, %v272
    %v303 = vpack.c.b16 %v275, %v273
    %v304 = vpack.c.b16 %v278, %v276
    %v305 = vpack.c.b16 %v279, %v277
    %v306 = vpack.c.b16 %v282, %v280
    %v307 = vpack.c.b16 %v283, %v281
    %v308 = vpack.c.b16 %v286, %v284
    %v309 = vpack.c.b16 %v287, %v285
    %v310 = vpack.c.b16 %v290, %v288
    %v311 = vpack.c.b16 %v291, %v289
    %v312 = vpack.c.b16 %v294, %v292
    %v313 = vpack.c.b16 %v295, %v293
    %v314 = vpack.c.b16 %v298, %v296
    %v315 = vpack.c.b16 %v299, %v297
    %332 = vmatpush.bf16.msra.mxu0 %v314
    %333 = vmatpush.bf16.msra.mxu0 %v312
    %334 = vmatpush.bf16.msra.mxu0 %v310
    %335 = vmatpush.bf16.msra.mxu0 %v308
    %336 = vmatpush.bf16.msra.mxu0 %v306
    %337 = vmatpush.bf16.msra.mxu0 %v304
    %338 = vmatpush.bf16.msra.mxu0 %v302
    %339 = vmatpush.bf16.msra.mxu0 %v300
    %340 = vmatmul.bf16.gmra.mxu0 %v229
    %v341 = vpop.f32.mrf.mxu0
    %v342 = vadd.f32 %v248, %v341
    %v343 = vpop.f32.mrf.mxu0
    %344 = vdwg.mxu0
    %345 = vmatpush.bf16.msra.mxu0 %v315
    %346 = vmatpush.bf16.msra.mxu0 %v313
    %347 = vmatpush.bf16.msra.mxu0 %v311
    %348 = vmatpush.bf16.msra.mxu0 %v309
    %349 = vmatpush.bf16.msra.mxu0 %v307
    %350 = vmatpush.bf16.msra.mxu0 %v305
    %351 = vmatpush.bf16.msra.mxu0 %v303
    %352 = vmatpush.bf16.msra.mxu0 %v301
    %353 = vmatmul.bf16.gmra.mxu0 %v229
    %v354 = vpop.f32.mrf.mxu0
    %v355 = vadd.f32 %v249, %v354
    %v356 = vpop.f32.mrf.mxu0
    %357 = vdwg.mxu0
    %v358 = vxor.u32 %v342, 2147483648
    %v359 = vxor.u32 %v355, 2147483648
    %v360 = vmul.f32 %v358, 1.442695
    %v361 = vpow.pop %v360
    %v362 = vmul.f32 %v359, 1.442695
    %v363 = vpow.pop %v362
    %v364 = vadd.f32 %v361, 1.0
    %v365 = vadd.f32 %v363, 1.0
    %v366 = vrcp.pop %v364
    %v367 = vmul.f32 %v364, %v366
    %v368 = vsub.f32 1.0, %v367
    %v369 = vmul.f32 %v366, %v368
    %v370 = vadd.f32 %v366, %v369
    %vm371 = vweird.f32 %v364
    %vm372 = vweird.f32 %v366
    %vm373 = vmor %vm371, %vm372
    %v374 = vsel %vm373, %v366, %v370
    %v375 = vand.u32 2147483647, %v364
    %vm376 = vcmp.eq.f32.partialorder %v375, 8.507059e+37
    %v377 = vand.u32 %v364, 2147483648
    %v378 = vor.u32 1.1754944e-38, %v377
    %v379 = vsel %vm376, %v378, %v374
    %v380 = vmul.f32 1.0, %v379
    %v381 = vrcp.pop %v365
    %v382 = vmul.f32 %v365, %v381
    %v383 = vsub.f32 1.0, %v382
    %v384 = vmul.f32 %v381, %v383
    %v385 = vadd.f32 %v381, %v384
    %vm386 = vweird.f32 %v365
    %vm387 = vweird.f32 %v381
    %vm388 = vmor %vm386, %vm387
    %v389 = vsel %vm388, %v381, %v385
    %v390 = vand.u32 2147483647, %v365
    %vm391 = vcmp.eq.f32.partialorder %v390, 8.507059e+37
    %v392 = vand.u32 %v365, 2147483648
    %v393 = vor.u32 1.1754944e-38, %v392
    %v394 = vsel %vm391, %v393, %v389
    %v395 = vmul.f32 1.0, %v394
    %396 = vst [vmem:[#allocation8] sm:$0xff] %v380
    %397 = vst [vmem:[#allocation8 + $0x8] sm:$0xff] %v395
    // Predicated region
    $region34: #{tpu_custom_call.1} parent=1 // pred_check
      _
    $region35: #{tpu_custom_call.1} parent=1 // pred_check_branch
      %399 = sbr.rel (0) target = $region37
    $region36: #{tpu_custom_call.1} parent=1 // pred_region
      %401 = vsyncadd [#allocation4], 0
      %s403 = sshll.u32 [#allocation8], 4
      %s404 = int_to_ptr.vmem [resolvable:$true] %s403
      %s405 = sshll.u32 %s5, 4
      %s406 = int_to_ptr.hbm [resolvable:$true] %s405
      %408 = dma.vmem_to_hbm [thread:$0]  %s404, 256, %s406, [#allocation4]
    $region37: #{tpu_custom_call.1} parent=1 // pred_fallthru
      _
    // Predicated region
    $region38: #{tpu_custom_call.1} parent=1 // pred_check
      _
    $region39: #{tpu_custom_call.1} parent=1 // pred_check_branch
      %410 = sbr.rel (0) target = $region41
    $region40: #{tpu_custom_call.1} parent=1 // pred_region
      %412 = dma.done [#allocation4], 256
    $region41: #{tpu_custom_call.1} parent=1 // pred_fallthru
      _
    %413 = vsyncpa [#allocation3], 1
    %414 = vsyncpa [#allocation6], 1
    %415 = vsyncpa [#allocation4], 1

// kernel: tpu_custom_call.1
$region0: #{tpu_custom_call.1}
  #allocation0 [shape = 'u32[]', space=smem, size = 0x4, offset = 0x4, fixed_abs, tag = 'smem constant byte address 0x4 - core index']
  #allocation1 [shape = 'u32[72,128]{1,0:T(1,128)}', space=vmem, size = 0x9000, scoped, tag = 'internal scratch']
  %s0 = inlined_call_operand.hbm [shape: f32[8,256], index: 0, kind: input, shape index: {}]
  %s1 = inlined_call_operand.hbm [shape: bf16[256,128], index: 1, kind: input, shape index: {}]
  %s2 = inlined_call_operand.vmem [shape: f32[1,128], index: 2, kind: input, shape index: {}]
  %s3 = inlined_call_operand.hbm [shape: bf16[128,256], index: 3, kind: input, shape index: {}]
  %s4 = inlined_call_operand.vmem [shape: f32[1,256], index: 4, kind: input, shape index: {}]
  %s5 = inlined_call_operand.hbm [shape: f32[8,256], index: 5, kind: output, shape index: {}]
  %s6 = sld [smem:[#allocation0]]
  $region42: #{tpu_custom_call.1} parent=0
    _
  %s8 = ssub.s32 1, %s6
  %s9 = scalar_select 0, %s8, %s6
  $region1: #{tpu_custom_call.1} parent=0
    #allocation2 [shape = 'u8[8192]{0}', space=vmem, size = 0x2000, scoped, tag = 'input window, operand 0, single buffered']
    #allocation3 [shape = 's32[1]{0}', space=sflag, size = 0x4, scoped, tag = 'scoped memory for tpu_custom_call.1']
    #allocation4 [shape = 's32[1]{0}', space=sflag, size = 0x4, scoped, tag = 'scoped memory for tpu_custom_call.1']
    #allocation5 [shape = 'u8[65536]{0}', space=vmem, size = 0x10000, scoped, tag = 'input window, operand 1, single buffered']
    #allocation6 [shape = 's32[1]{0}', space=sflag, size = 0x4, scoped, tag = 'scoped memory for tpu_custom_call.1']
    #allocation7 [shape = 'u8[65536]{0}', space=vmem, size = 0x10000, scoped, tag = 'input window, operand 3, single buffered']
    #allocation8 [shape = 'u8[8192]{0}', space=vmem, size = 0x2000, scoped, tag = 'output window, operand 0, single buffered']
    %10 = vsyncpa [#allocation3], 0
    %11 = vsyncpa [#allocation6], 0
    %12 = vsyncpa [#allocation4], 0
    // Predicated region
    $region2: #{tpu_custom_call.1} parent=1 // pred_check
      _
    $region3: #{tpu_custom_call.1} parent=1 // pred_check_branch
      %14 = sbr.rel (0) target = $region5
    $region4: #{tpu_custom_call.1} parent=1 // pred_region
      %16 = vsyncadd [#allocation3], 0
      %s18 = sshll.u32 %s0, 4
      %s19 = int_to_ptr.hbm [resolvable:$true] %s18
      %s20 = sshll.u32 [#allocation2], 4
      %s21 = int_to_ptr.vmem [resolvable:$true] %s20
      %23 = dma.hbm_to_vmem [thread:$0]  %s19, 256, %s21, [#allocation3]
    $region5: #{tpu_custom_call.1} parent=1 // pred_fallthru
      _
    // Predicated region
    $region6: #{tpu_custom_call.1} parent=1 // pred_check
      _
    $region7: #{tpu_custom_call.1} parent=1 // pred_check_branch
      %25 = sbr.rel (0) target = $region9
    $region8: #{tpu_custom_call.1} parent=1 // pred_region
      %27 = vsyncadd [#allocation6], 0
      %s28 = sshll.u32 %s1, 4
      %s29 = int_to_ptr.hbm [resolvable:$true] %s28
      %s30 = sshll.u32 [#allocation5], 4
      %s31 = int_to_ptr.vmem [resolvable:$true] %s30
      %36 = dma.hbm_to_vmem [thread:$0]  %s29, 2048, %s31, [#allocation6], 64, 64, 4
    $region9: #{tpu_custom_call.1} parent=1 // pred_fallthru
      _
    // Predicated region
    $region10: #{tpu_custom_call.1} parent=1 // pred_check
      _
    $region11: #{tpu_custom_call.1} parent=1 // pred_check_branch
      %38 = sbr.rel (0) target = $region13
    $region12: #{tpu_custom_call.1} parent=1 // pred_region
      _
    $region13: #{tpu_custom_call.1} parent=1 // pred_fallthru
      _
    // Predicated region
    $region14: #{tpu_custom_call.1} parent=1 // pred_check
      _
    $region15: #{tpu_custom_call.1} parent=1 // pred_check_branch
      %40 = sbr.rel (0) target = $region17
    $region16: #{tpu_custom_call.1} parent=1 // pred_region
      %42 = vsyncadd [#allocation6], 0
      %s43 = sshll.u32 %s3, 4
      %s44 = int_to_ptr.hbm [resolvable:$true] %s43
      %s45 = sshll.u32 [#allocation7], 4
      %s46 = int_to_ptr.vmem [resolvable:$true] %s45
      %51 = dma.hbm_to_vmem [thread:$0]  %s44, 2048, %s46, [#allocation6], 128, 128, 8
    $region17: #{tpu_custom_call.1} parent=1 // pred_fallthru
      _
    // Predicated region
    $region18: #{tpu_custom_call.1} parent=1 // pred_check
      _
    $region19: #{tpu_custom_call.1} parent=1 // pred_check_branch
      %53 = sbr.rel (0) target = $region21
    $region20: #{tpu_custom_call.1} parent=1 // pred_region
      _
    $region21: #{tpu_custom_call.1} parent=1 // pred_fallthru
      _
    // Predicated region
    $region22: #{tpu_custom_call.1} parent=1 // pred_check
      _
    $region23: #{tpu_custom_call.1} parent=1 // pred_check_branch
      %55 = sbr.rel (0) target = $region25
    $region24: #{tpu_custom_call.1} parent=1 // pred_region
      %57 = dma.done [#allocation3], 256
    $region25: #{tpu_custom_call.1} parent=1 // pred_fallthru
      _
    // Predicated region
    $region26: #{tpu_custom_call.1} parent=1 // pred_check
      _
    $region27: #{tpu_custom_call.1} parent=1 // pred_check_branch
      %59 = sbr.rel (0) target = $region29
    $region28: #{tpu_custom_call.1} parent=1 // pred_region
      %61 = dma.done [#allocation6], 2048
    $region29: #{tpu_custom_call.1} parent=1 // pred_fallthru
      _
    // Predicated region
    $region30: #{tpu_custom_call.1} parent=1 // pred_check
      _
    $region31: #{tpu_custom_call.1} parent=1 // pred_check_branch
      %63 = sbr.rel (0) target = $region33
    $region32: #{tpu_custom_call.1} parent=1 // pred_region
      %65 = dma.done [#allocation6], 2048
    $region33: #{tpu_custom_call.1} parent=1 // pred_fallthru
      _
    %v66 = vld [vmem:[#allocation2] sm:$0xff]
    %v67 = vld [vmem:[#allocation2 + $0x8] sm:$0xff]
    %v68 = vpack.c.bf16 %v66, %v66
    %v69 = vpack.c.bf16 %v67, %v67
    %v70 = vld [vmem:[#allocation5] sm:$0xf]
    %v71 = vld [vmem:[#allocation5 + $0x4] sm:$0xf]
    %v72 = vld [vmem:[#allocation5 + $0x8] sm:$0xf]
    %v73 = vld [vmem:[#allocation5 + $0xc] sm:$0xf]
    %v74 = vld [vmem:[#allocation5 + $0x10] sm:$0xf]
    %v75 = vld [vmem:[#allocation5 + $0x14] sm:$0xf]
    %v76 = vld [vmem:[#allocation5 + $0x18] sm:$0xf]
    %v77 = vld [vmem:[#allocation5 + $0x1c] sm:$0xf]
    %v78 = vld [vmem:[#allocation5 + $0x20] sm:$0xf]
    %v79 = vld [vmem:[#allocation5 + $0x24] sm:$0xf]
    %v80 = vld [vmem:[#allocation5 + $0x28] sm:$0xf]
    %v81 = vld [vmem:[#allocation5 + $0x2c] sm:$0xf]
    %v82 = vld [vmem:[#allocation5 + $0x30] sm:$0xf]
    %v83 = vld [vmem:[#allocation5 + $0x34] sm:$0xf]
    %v84 = vld [vmem:[#allocation5 + $0x38] sm:$0xf]
    %v85 = vld [vmem:[#allocation5 + $0x3c] sm:$0xf]
    %v86 = vld [vmem:[#allocation5 + $0x40] sm:$0xf]
    %v87 = vld [vmem:[#allocation5 + $0x44] sm:$0xf]
    %v88 = vld [vmem:[#allocation5 + $0x48] sm:$0xf]
    %v89 = vld [vmem:[#allocation5 + $0x4c] sm:$0xf]
    %v90 = vld [vmem:[#allocation5 + $0x50] sm:$0xf]
    %v91 = vld [vmem:[#allocation5 + $0x54] sm:$0xf]
    %v92 = vld [vmem:[#allocation5 + $0x58] sm:$0xf]
    %v93 = vld [vmem:[#allocation5 + $0x5c] sm:$0xf]
    %v94 = vld [vmem:[#allocation5 + $0x60] sm:$0xf]
    %v95 = vld [vmem:[#allocation5 + $0x64] sm:$0xf]
    %v96 = vld [vmem:[#allocation5 + $0x68] sm:$0xf]
    %v97 = vld [vmem:[#allocation5 + $0x6c] sm:$0xf]
    %v98 = vld [vmem:[#allocation5 + $0x70] sm:$0xf]
    %v99 = vld [vmem:[#allocation5 + $0x74] sm:$0xf]
    %v100 = vld [vmem:[#allocation5 + $0x78] sm:$0xf]
    %v101 = vld [vmem:[#allocation5 + $0x7c] sm:$0xf]
    %v102 = vld [vmem:[%s2] sm:$0x1]
    %v104 = vperm.slane %v102, 0
    %v138 = vunpack.c.l.b16 %v70
    %v139 = vunpack.c.l.b16 %v71
    %v140 = vunpack.c.l.b16 %v72
    %v141 = vunpack.c.l.b16 %v73
    %v142 = vunpack.c.l.b16 %v74
    %v143 = vunpack.c.l.b16 %v75
    %v144 = vunpack.c.l.b16 %v76
    %v145 = vunpack.c.l.b16 %v77
    %v146 = vunpack.c.l.b16 %v78
    %v147 = vunpack.c.l.b16 %v79
    %v148 = vunpack.c.l.b16 %v80
    %v149 = vunpack.c.l.b16 %v81
    %v150 = vunpack.c.l.b16 %v82
    %v151 = vunpack.c.l.b16 %v83
    %v152 = vunpack.c.l.b16 %v84
    %v153 = vunpack.c.l.b16 %v85
    %v154 = vunpack.c.l.b16 %v86
    %v155 = vunpack.c.l.b16 %v87
    %v156 = vunpack.c.l.b16 %v88
    %v157 = vunpack.c.l.b16 %v89
    %v158 = vunpack.c.l.b16 %v90
    %v159 = vunpack.c.l.b16 %v91
    %v160 = vunpack.c.l.b16 %v92
    %v161 = vunpack.c.l.b16 %v93
    %v162 = vunpack.c.l.b16 %v94
    %v163 = vunpack.c.l.b16 %v95
    %v164 = vunpack.c.l.b16 %v96
    %v165 = vunpack.c.l.b16 %v97
    %v166 = vunpack.c.l.b16 %v98
    %v167 = vunpack.c.l.b16 %v99
    %v168 = vunpack.c.l.b16 %v100
    %v169 = vunpack.c.l.b16 %v101
    %v170 = vpack.c.b16 %v139, %v138
    %v171 = vpack.c.b16 %v141, %v140
    %v172 = vpack.c.b16 %v143, %v142
    %v173 = vpack.c.b16 %v145, %v144
    %v174 = vpack.c.b16 %v147, %v146
    %v175 = vpack.c.b16 %v149, %v148
    %v176 = vpack.c.b16 %v151, %v150
    %v177 = vpack.c.b16 %v153, %v152
    %v178 = vpack.c.b16 %v155, %v154
    %v179 = vpack.c.b16 %v157, %v156
    %v180 = vpack.c.b16 %v159, %v158
    %v181 = vpack.c.b16 %v161, %v160
    %v182 = vpack.c.b16 %v163, %v162
    %v183 = vpack.c.b16 %v165, %v164
    %v184 = vpack.c.b16 %v167, %v166
    %v185 = vpack.c.b16 %v169, %v168
    %202 = vmatpush.bf16.msra.mxu0 %v177
    %203 = vmatpush.bf16.msra.mxu0 %v176
    %204 = vmatpush.bf16.msra.mxu0 %v175
    %205 = vmatpush.bf16.msra.mxu0 %v174
    %206 = vmatpush.bf16.msra.mxu0 %v173
    %207 = vmatpush.bf16.msra.mxu0 %v172
    %208 = vmatpush.bf16.msra.mxu0 %v171
    %209 = vmatpush.bf16.msra.mxu0 %v170
    %210 = vmatmul.bf16.gmra.mxu0 %v68
    %v211 = vpop.f32.mrf.mxu0
    %v212 = vadd.f32 %v104, %v211
    %v213 = vpop.f32.mrf.mxu0
    %214 = vdwg.mxu0
    %215 = vmatpush.bf16.msra.mxu0 %v185
    %216 = vmatpush.bf16.msra.mxu0 %v184
    %217 = vmatpush.bf16.msra.mxu0 %v183
    %218 = vmatpush.bf16.msra.mxu0 %v182
    %219 = vmatpush.bf16.msra.mxu0 %v181
    %220 = vmatpush.bf16.msra.mxu0 %v180
    %221 = vmatpush.bf16.msra.mxu0 %v179
    %222 = vmatpush.bf16.msra.mxu0 %v178
    %223 = vmatmul.bf16.gmra.mxu0 %v69
    %v224 = vpop.f32.mrf.mxu0
    %v225 = vadd.f32 %v212, %v224
    %v226 = vpop.f32.mrf.mxu0
    %227 = vdwg.mxu0
    %v228 = vmax.f32 %v225, 0.0
    %v229 = vpack.c.bf16 %v228, %v228
    %v230 = vld [vmem:[#allocation7] sm:$0xff]
    %v231 = vld [vmem:[#allocation7 + $0x8] sm:$0xff]
    %v232 = vld [vmem:[#allocation7 + $0x10] sm:$0xff]
    %v233 = vld [vmem:[#allocation7 + $0x18] sm:$0xff]
    %v234 = vld [vmem:[#allocation7 + $0x20] sm:$0xff]
    %v235 = vld [vmem:[#allocation7 + $0x28] sm:$0xff]
    %v236 = vld [vmem:[#allocation7 + $0x30] sm:$0xff]
    %v237 = vld [vmem:[#allocation7 + $0x38] sm:$0xff]
    %v238 = vld [vmem:[#allocation7 + $0x40] sm:$0xff]
    %v239 = vld [vmem:[#allocation7 + $0x48] sm:$0xff]
    %v240 = vld [vmem:[#allocation7 + $0x50] sm:$0xff]
    %v241 = vld [vmem:[#allocation7 + $0x58] sm:$0xff]
    %v242 = vld [vmem:[#allocation7 + $0x60] sm:$0xff]
    %v243 = vld [vmem:[#allocation7 + $0x68] sm:$0xff]
    %v244 = vld [vmem:[#allocation7 + $0x70] sm:$0xff]
    %v245 = vld [vmem:[#allocation7 + $0x78] sm:$0xff]
    %v246 = vld [vmem:[%s4] sm:$0x3]
    %v248 = vperm.slane %v246, 0
    %v249 = vperm.slane %v246, 1
    %v268 = vunpack.c.l.b16 %v230
    %v269 = vunpack.c.h.b16 %v230
    %v270 = vunpack.c.l.b16 %v231
    %v271 = vunpack.c.h.b16 %v231
    %v272 = vunpack.c.l.b16 %v232
    %v273 = vunpack.c.h.b16 %v232
    %v274 = vunpack.c.l.b16 %v233
    %v275 = vunpack.c.h.b16 %v233
    %v276 = vunpack.c.l.b16 %v234
    %v277 = vunpack.c.h.b16 %v234
    %v278 = vunpack.c.l.b16 %v235
    %v279 = vunpack.c.h.b16 %v235
    %v280 = vunpack.c.l.b16 %v236
    %v281 = vunpack.c.h.b16 %v236
    %v282 = vunpack.c.l.b16 %v237
    %v283 = vunpack.c.h.b16 %v237
    %v284 = vunpack.c.l.b16 %v238
    %v285 = vunpack.c.h.b16 %v238
    %v286 = vunpack.c.l.b16 %v239
    %v287 = vunpack.c.h.b16 %v239
    %v288 = vunpack.c.l.b16 %v240
    %v289 = vunpack.c.h.b16 %v240
    %v290 = vunpack.c.l.b16 %v241
    %v291 = vunpack.c.h.b16 %v241
    %v292 = vunpack.c.l.b16 %v242
    %v293 = vunpack.c.h.b16 %v242
    %v294 = vunpack.c.l.b16 %v243
    %v295 = vunpack.c.h.b16 %v243
    %v296 = vunpack.c.l.b16 %v244
    %v297 = vunpack.c.h.b16 %v244
    %v298 = vunpack.c.l.b16 %v245
    %v299 = vunpack.c.h.b16 %v245
    %v300 = vpack.c.b16 %v270, %v268
    %v301 = vpack.c.b16 %v271, %v269
    %v302 = vpack.c.b16 %v274, %v272
    %v303 = vpack.c.b16 %v275, %v273
    %v304 = vpack.c.b16 %v278, %v276
    %v305 = vpack.c.b16 %v279, %v277
    %v306 = vpack.c.b16 %v282, %v280
    %v307 = vpack.c.b16 %v283, %v281
    %v308 = vpack.c.b16 %v286, %v284
    %v309 = vpack.c.b16 %v287, %v285
    %v310 = vpack.c.b16 %v290, %v288
    %v311 = vpack.c.b16 %v291, %v289
    %v312 = vpack.c.b16 %v294, %v292
    %v313 = vpack.c.b16 %v295, %v293
    %v314 = vpack.c.b16 %v298, %v296
    %v315 = vpack.c.b16 %v299, %v297
    %332 = vmatpush.bf16.msra.mxu0 %v314
    %333 = vmatpush.bf16.msra.mxu0 %v312
    %334 = vmatpush.bf16.msra.mxu0 %v310
    %335 = vmatpush.bf16.msra.mxu0 %v308
    %336 = vmatpush.bf16.msra.mxu0 %v306
    %337 = vmatpush.bf16.msra.mxu0 %v304
    %338 = vmatpush.bf16.msra.mxu0 %v302
    %339 = vmatpush.bf16.msra.mxu0 %v300
    %340 = vmatmul.bf16.gmra.mxu0 %v229
    %v341 = vpop.f32.mrf.mxu0
    %v342 = vadd.f32 %v248, %v341
    %v343 = vpop.f32.mrf.mxu0
    %344 = vdwg.mxu0
    %345 = vmatpush.bf16.msra.mxu0 %v315
    %346 = vmatpush.bf16.msra.mxu0 %v313
    %347 = vmatpush.bf16.msra.mxu0 %v311
    %348 = vmatpush.bf16.msra.mxu0 %v309
    %349 = vmatpush.bf16.msra.mxu0 %v307
    %350 = vmatpush.bf16.msra.mxu0 %v305
    %351 = vmatpush.bf16.msra.mxu0 %v303
    %352 = vmatpush.bf16.msra.mxu0 %v301
    %353 = vmatmul.bf16.gmra.mxu0 %v229
    %v354 = vpop.f32.mrf.mxu0
    %v355 = vadd.f32 %v249, %v354
    %v356 = vpop.f32.mrf.mxu0
    %357 = vdwg.mxu0
    %v358 = vxor.u32 %v342, 2147483648
    %v359 = vxor.u32 %v355, 2147483648
    %v360 = vmul.f32 %v358, 1.442695
    %v361 = vpow.pop %v360
    %v362 = vmul.f32 %v359, 1.442695
    %v363 = vpow.pop %v362
    %v364 = vadd.f32 %v361, 1.0
    %v365 = vadd.f32 %v363, 1.0
    %v366 = vrcp.pop %v364
    %v367 = vmul.f32 %v364, %v366
    %v368 = vsub.f32 1.0, %v367
    %v369 = vmul.f32 %v366, %v368
    %v370 = vadd.f32 %v366, %v369
    %vm371 = vweird.f32 %v364
    %vm372 = vweird.f32 %v366
    %vm373 = vmor %vm371, %vm372
    %v374 = vsel %vm373, %v366, %v370
    %v375 = vand.u32 2147483647, %v364
    %vm376 = vcmp.eq.f32.partialorder %v375, 8.507059e+37
    %v377 = vand.u32 %v364, 2147483648
    %v378 = vor.u32 1.1754944e-38, %v377
    %v379 = vsel %vm376, %v378, %v374
    %v380 = vmul.f32 1.0, %v379
    %v381 = vrcp.pop %v365
    %v382 = vmul.f32 %v365, %v381
    %v383 = vsub.f32 1.0, %v382
    %v384 = vmul.f32 %v381, %v383
    %v385 = vadd.f32 %v381, %v384
    %vm386 = vweird.f32 %v365
    %vm387 = vweird.f32 %v381
    %vm388 = vmor %vm386, %vm387
    %v389 = vsel %vm388, %v381, %v385
    %v390 = vand.u32 2147483647, %v365
    %vm391 = vcmp.eq.f32.partialorder %v390, 8.507059e+37
    %v392 = vand.u32 %v365, 2147483648
    %v393 = vor.u32 1.1754944e-38, %v392
    %v394 = vsel %vm391, %v393, %v389
    %v395 = vmul.f32 1.0, %v394
    %396 = vst [vmem:[#allocation8] sm:$0xff] %v380
    %397 = vst [vmem:[#allocation8 + $0x8] sm:$0xff] %v395
    // Predicated region
    $region34: #{tpu_custom_call.1} parent=1 // pred_check
      _
    $region35: #{tpu_custom_call.1} parent=1 // pred_check_branch
      %399 = sbr.rel (0) target = $region37
    $region36: #{tpu_custom_call.1} parent=1 // pred_region
      %401 = vsyncadd [#allocation4], 0
      %s403 = sshll.u32 [#allocation8], 4
      %s404 = int_to_ptr.vmem [resolvable:$true] %s403
      %s405 = sshll.u32 %s5, 4
      %s406 = int_to_ptr.hbm [resolvable:$true] %s405
      %408 = dma.vmem_to_hbm [thread:$0]  %s404, 256, %s406, [#allocation4]
    $region37: #{tpu_custom_call.1} parent=1 // pred_fallthru
      _
    // Predicated region
    $region38: #{tpu_custom_call.1} parent=1 // pred_check
      _
    $region39: #{tpu_custom_call.1} parent=1 // pred_check_branch
      %410 = sbr.rel (0) target = $region41
    $region40: #{tpu_custom_call.1} parent=1 // pred_region
      %412 = dma.done [#allocation4], 256
    $region41: #{tpu_custom_call.1} parent=1 // pred_fallthru
      _
    %413 = vsyncpa [#allocation3], 1
    %414 = vsyncpa [#allocation6], 1
    %415 = vsyncpa [#allocation4], 1

</llo_original>
